<compile_context>
chip_gen: v7x
topology: tpu7x:2x2x1
jax: 0.10.0
libtpu: 0.0.40
codegen_flags: <defaults>
</compile_context>

<pallas_src>
import jax
import jax.numpy as jnp
from jax.experimental import pallas as pl
from jax.experimental.pallas import tpu as pltpu

_LANES = 128            # TPU vreg lane width
_DEF_TILE_ROWS = 1024   # 1024 * 128 = 131072 samples per grid step
_MAX_TILE_ROWS = 4096   # caps double-buffered in+out VMEM footprint at 24 MiB


def _round_up(n: int, m: int) -> int:
    return ((n + m - 1) // m) * m


def lr_classifier_kernel(w_ref, b_ref, x_ref, o_ref):
    """One batch tile of sigmoid(W @ x + b).

    w_ref : SMEM (3, 3) float32, PyTorch layout (out_features, in_features)
    b_ref : SMEM (3,)   float32
    x_ref : VMEM (3, TR, 128) -- feature planes, batch dense on sublanes+lanes
    o_ref : VMEM (3, TR, 128)
    """
    x = x_ref[...]                       # single whole-block load
    x0, x1, x2 = x[0], x[1], x[2]        # (TR, 128) each, fully dense vregs

    rows = []
    for j in range(3):
        # 3x3 contraction as scalar-broadcast FMAs on the VPU (MXU stays idle).
        z = (w_ref[j, 0] * x0
             + w_ref[j, 1] * x1
             + w_ref[j, 2] * x2
             + b_ref[j])
        # sigmoid(z) = 0.5*tanh(z/2) + 0.5 : transcendental on the EUP slot,
        # no f32 divide on the VPU, keeps ~f32 accuracy.
        rows.append(0.5 * jnp.tanh(0.5 * z) + 0.5)

    # One dense whole-block store.
    o_ref[...] = jnp.stack(rows, axis=0).astype(o_ref.dtype)


def lr_classifier_feature_major(x_t, weight, bias, *, tile_rows=_DEF_TILE_ROWS):
    """sigmoid(W @ x_t + b) for a feature-major activation.

    x_t: (3, B) -> returns (3, B).  No wrapper-side layout passes: when
    B % 128 == 0 the only HBM traffic is the kernel's own in/out stream.
    """
    F, B = x_t.shape
    O, F2 = weight.shape
    if not (F == 3 and F2 == 3 and O == 3):
        raise ValueError("LR_Classifier is a Linear(3, 3) module")

    weight = jnp.asarray(weight, jnp.float32)
    bias = jnp.asarray(bias, jnp.float32)

    # Align the batch to 128 samples only (NOT to the tile) -- the ragged last
    # row-block is handled by Pallas partial-block masking inside the grid.
    lanes = max(_round_up(B, _LANES), _LANES)
    if lanes != B:
        # Ragged batch: one small pad copy; padded samples compute sigmoid(b)
        # and are sliced off below.
        x_t = jnp.pad(x_t, ((0, 0), (0, lanes - B)))
    rows = lanes // _LANES
    x3 = x_t.reshape(F, rows, _LANES)    # free bitcast: same bytes, no HBM pass

    # Tile selection: biggest legal row-block, but keep >= 2 grid steps when
    # there is enough work so ("parallel",) can shard across v7x's 2 TCs.
    tr = min(_round_up(max(int(tile_rows), 8), 8), _MAX_TILE_ROWS)
    if tr >= rows:
        tr = rows                        # single block spanning the full dim
        if rows >= 16:
            tr = _round_up(pl.cdiv(rows, 2), 8)
    grid = (pl.cdiv(rows, tr),)

    # in + out, double-buffered, no sublane padding in this layout.
    dbuf_bytes = 2 * 2 * F * tr * _LANES * 4
    vmem_limit = int(min(max(dbuf_bytes + (8 << 20), 24 << 20), 48 << 20))

    out3 = pl.pallas_call(
        lr_classifier_kernel,
        out_shape=jax.ShapeDtypeStruct((O, rows, _LANES), x_t.dtype),
        grid=grid,
        in_specs=[
            # Tiny parameters live in SMEM (scalar path), loaded once.
            pl.BlockSpec(memory_space=pltpu.MemorySpace.SMEM),   # weight (3, 3)
            pl.BlockSpec(memory_space=pltpu.MemorySpace.SMEM),   # bias   (3,)
            # Streamed, auto double-buffered batch row-blocks.
            pl.BlockSpec((F, tr, _LANES), lambda i: (0, i, 0)),
        ],
        out_specs=pl.BlockSpec((O, tr, _LANES), lambda i: (0, i, 0)),
        compiler_params=pltpu.CompilerParams(
            dimension_semantics=("parallel",),
            vmem_limit_bytes=vmem_limit,
        ),
    )(weight, bias, x3)

    out_t = out3.reshape(O, lanes)
    if lanes != B:
        out_t = out_t[:, :B]
    return out_t


def lr_classifier(x, weight, bias, *, tile_rows=_DEF_TILE_ROWS):
    """PyTorch-contract forward: x (B, 3) -> sigmoid(x @ W^T + b), shape (B, 3).

    NOTE: the two jnp.transpose calls below are each an extra HBM pass added by
    XLA around the kernel.  If the surrounding model can produce / consume
    feature-major (3, B) activations, call lr_classifier_feature_major directly
    and skip them.  With mandatory (B, 3) I/O at feature width 3, a single
    fused XLA sigmoid(x @ W.T + b) is the realistic competitor end-to-end.
    """
    x_t = jnp.transpose(x)
    out_t = lr_classifier_feature_major(x_t, weight, bias, tile_rows=tile_rows)
    return jnp.transpose(out_t)


if __name__ == "__main__":
    key = jax.random.PRNGKey(0)
    kx, kw, kb = jax.random.split(key, 3)

    in_features = 3
    out_features = 3

    # Deterministic synthetic parameters (PyTorch Linear-like uniform init).
    bound = 1.0 / (in_features ** 0.5)
    weight = jax.random.uniform(kw, (out_features, in_features),
                                minval=-bound, maxval=bound, dtype=jnp.float32)
    bias = jax.random.uniform(kb, (out_features,),
                              minval=-bound, maxval=bound, dtype=jnp.float32)

    def ref(xx):
        return jax.nn.sigmoid(xx @ weight.T + bias)

    # Small PyTorch-layout batch.
    x = jax.random.normal(kx, (8, in_features), dtype=jnp.float32)
    y = jax.block_until_ready(lr_classifier(x, weight, bias))
    assert y.shape == (8, out_features)
    assert jnp.allclose(y, ref(x), atol=1e-5, rtol=1e-5), "mismatch vs reference"

    # Ragged batch: exercises the 128-alignment pad + partial-block handling.
    x2 = jax.random.normal(jax.random.PRNGKey(1), (300, in_features),
                           dtype=jnp.float32)
    y2 = jax.block_until_ready(lr_classifier(x2, weight, bias))
    assert jnp.allclose(y2, ref(x2), atol=1e-5, rtol=1e-5), "tail mismatch"

    # Feature-major fast path (no wrapper transposes); default tiling hits the
    # "split for >=2 grid steps" branch.
    x3 = jax.random.normal(jax.random.PRNGKey(2), (in_features, 4096),
                           dtype=jnp.float32)
    y3 = jax.block_until_ready(lr_classifier_feature_major(x3, weight, bias))
    y3_ref = jax.nn.sigmoid(weight @ x3 + bias[:, None])
    assert jnp.allclose(y3, y3_ref, atol=1e-5, rtol=1e-5), "feature-major mismatch"

    # Multi-step grid path with a small forced tile.
    y4 = jax.block_until_ready(
        lr_classifier_feature_major(x3, weight, bias, tile_rows=8))
    assert jnp.allclose(y4, y3_ref, atol=1e-5, rtol=1e-5), "multi-tile mismatch"

    print("KERNEL_OK")
</pallas_src>

<mosaic_0001>
module attributes {stable_mosaic.version = 11 : i64} {
  func.func @lr_classifier_kernel(%arg0: i32, %arg1: memref<3x3xf32, #tpu.memory_space<smem>>, %arg2: memref<3xf32, #tpu.memory_space<smem>>, %arg3: memref<3x1x128xf32, #tpu.memory_space<vmem>>, %arg4: memref<3x1x128xf32, #tpu.memory_space<vmem>>) attributes {dimension_semantics = [#tpu.dimension_semantics<parallel>], iteration_bounds = array<i64: 1>, scalar_prefetch = 0 : i64, scratch_operands = 0 : i64, tpu.core_type = #tpu.core_type<tc>, window_params = [{transform_indices = @transform_0, window_bounds = array<i64: 3, 3>}, {transform_indices = @transform_1, window_bounds = array<i64: 3>}, {transform_indices = @transform_2, window_bounds = array<i64: 3, 1, 128>}, {transform_indices = @transform_3, window_bounds = array<i64: 3, 1, 128>}]} {
    %c0 = arith.constant 0 : index
    %c0_0 = arith.constant 0 : index
    %c0_1 = arith.constant 0 : index
    %0 = vector.load %arg3[%c0, %c0_0, %c0_1] : memref<3x1x128xf32, #tpu.memory_space<vmem>>, vector<3x1x128xf32>
    %1 = vector.extract_strided_slice %0 {offsets = [0, 0, 0], sizes = [1, 1, 128], strides = [1, 1, 1]} : vector<3x1x128xf32> to vector<1x1x128xf32>
    %2 = vector.shape_cast %1 : vector<1x1x128xf32> to vector<1x128xf32>
    %3 = vector.extract_strided_slice %0 {offsets = [1, 0, 0], sizes = [1, 1, 128], strides = [1, 1, 1]} : vector<3x1x128xf32> to vector<1x1x128xf32>
    %4 = vector.shape_cast %3 : vector<1x1x128xf32> to vector<1x128xf32>
    %5 = vector.extract_strided_slice %0 {offsets = [2, 0, 0], sizes = [1, 1, 128], strides = [1, 1, 1]} : vector<3x1x128xf32> to vector<1x1x128xf32>
    %6 = vector.shape_cast %5 : vector<1x1x128xf32> to vector<1x128xf32>
    %c0_2 = arith.constant 0 : index
    %c0_3 = arith.constant 0 : index
    %7 = memref.load %arg1[%c0_2, %c0_3] : memref<3x3xf32, #tpu.memory_space<smem>>
    %8 = vector.broadcast %7 : f32 to vector<1x128xf32>
    %9 = arith.mulf %8, %2 : vector<1x128xf32>
    %c0_4 = arith.constant 0 : index
    %c1 = arith.constant 1 : index
    %10 = memref.load %arg1[%c0_4, %c1] : memref<3x3xf32, #tpu.memory_space<smem>>
    %11 = vector.broadcast %10 : f32 to vector<1x128xf32>
    %12 = arith.mulf %11, %4 : vector<1x128xf32>
    %13 = arith.addf %9, %12 : vector<1x128xf32>
    %c0_5 = arith.constant 0 : index
    %c2 = arith.constant 2 : index
    %14 = memref.load %arg1[%c0_5, %c2] : memref<3x3xf32, #tpu.memory_space<smem>>
    %15 = vector.broadcast %14 : f32 to vector<1x128xf32>
    %16 = arith.mulf %15, %6 : vector<1x128xf32>
    %17 = arith.addf %13, %16 : vector<1x128xf32>
    %c0_6 = arith.constant 0 : index
    %18 = memref.load %arg2[%c0_6] : memref<3xf32, #tpu.memory_space<smem>>
    %19 = vector.broadcast %18 : f32 to vector<1x128xf32>
    %20 = arith.addf %17, %19 : vector<1x128xf32>
    %cst = arith.constant 5.000000e-01 : f32
    %21 = vector.broadcast %cst : f32 to vector<1x128xf32>
    %22 = arith.mulf %21, %20 : vector<1x128xf32>
    %23 = math.tanh %22 : vector<1x128xf32>
    %cst_7 = arith.constant 5.000000e-01 : f32
    %24 = vector.broadcast %cst_7 : f32 to vector<1x128xf32>
    %25 = arith.mulf %24, %23 : vector<1x128xf32>
    %cst_8 = arith.constant 5.000000e-01 : f32
    %26 = vector.broadcast %cst_8 : f32 to vector<1x128xf32>
    %27 = arith.addf %25, %26 : vector<1x128xf32>
    %c1_9 = arith.constant 1 : index
    %c0_10 = arith.constant 0 : index
    %28 = memref.load %arg1[%c1_9, %c0_10] : memref<3x3xf32, #tpu.memory_space<smem>>
    %29 = vector.broadcast %28 : f32 to vector<1x128xf32>
    %30 = arith.mulf %29, %2 : vector<1x128xf32>
    %c1_11 = arith.constant 1 : index
    %c1_12 = arith.constant 1 : index
    %31 = memref.load %arg1[%c1_11, %c1_12] : memref<3x3xf32, #tpu.memory_space<smem>>
    %32 = vector.broadcast %31 : f32 to vector<1x128xf32>
    %33 = arith.mulf %32, %4 : vector<1x128xf32>
    %34 = arith.addf %30, %33 : vector<1x128xf32>
    %c1_13 = arith.constant 1 : index
    %c2_14 = arith.constant 2 : index
    %35 = memref.load %arg1[%c1_13, %c2_14] : memref<3x3xf32, #tpu.memory_space<smem>>
    %36 = vector.broadcast %35 : f32 to vector<1x128xf32>
    %37 = arith.mulf %36, %6 : vector<1x128xf32>
    %38 = arith.addf %34, %37 : vector<1x128xf32>
    %c1_15 = arith.constant 1 : index
    %39 = memref.load %arg2[%c1_15] : memref<3xf32, #tpu.memory_space<smem>>
    %40 = vector.broadcast %39 : f32 to vector<1x128xf32>
    %41 = arith.addf %38, %40 : vector<1x128xf32>
    %cst_16 = arith.constant 5.000000e-01 : f32
    %42 = vector.broadcast %cst_16 : f32 to vector<1x128xf32>
    %43 = arith.mulf %42, %41 : vector<1x128xf32>
    %44 = math.tanh %43 : vector<1x128xf32>
    %cst_17 = arith.constant 5.000000e-01 : f32
    %45 = vector.broadcast %cst_17 : f32 to vector<1x128xf32>
    %46 = arith.mulf %45, %44 : vector<1x128xf32>
    %cst_18 = arith.constant 5.000000e-01 : f32
    %47 = vector.broadcast %cst_18 : f32 to vector<1x128xf32>
    %48 = arith.addf %46, %47 : vector<1x128xf32>
    %c2_19 = arith.constant 2 : index
    %c0_20 = arith.constant 0 : index
    %49 = memref.load %arg1[%c2_19, %c0_20] : memref<3x3xf32, #tpu.memory_space<smem>>
    %50 = vector.broadcast %49 : f32 to vector<1x128xf32>
    %51 = arith.mulf %50, %2 : vector<1x128xf32>
    %c2_21 = arith.constant 2 : index
    %c1_22 = arith.constant 1 : index
    %52 = memref.load %arg1[%c2_21, %c1_22] : memref<3x3xf32, #tpu.memory_space<smem>>
    %53 = vector.broadcast %52 : f32 to vector<1x128xf32>
    %54 = arith.mulf %53, %4 : vector<1x128xf32>
    %55 = arith.addf %51, %54 : vector<1x128xf32>
    %c2_23 = arith.constant 2 : index
    %c2_24 = arith.constant 2 : index
    %56 = memref.load %arg1[%c2_23, %c2_24] : memref<3x3xf32, #tpu.memory_space<smem>>
    %57 = vector.broadcast %56 : f32 to vector<1x128xf32>
    %58 = arith.mulf %57, %6 : vector<1x128xf32>
    %59 = arith.addf %55, %58 : vector<1x128xf32>
    %c2_25 = arith.constant 2 : index
    %60 = memref.load %arg2[%c2_25] : memref<3xf32, #tpu.memory_space<smem>>
    %61 = vector.broadcast %60 : f32 to vector<1x128xf32>
    %62 = arith.addf %59, %61 : vector<1x128xf32>
    %cst_26 = arith.constant 5.000000e-01 : f32
    %63 = vector.broadcast %cst_26 : f32 to vector<1x128xf32>
    %64 = arith.mulf %63, %62 : vector<1x128xf32>
    %65 = math.tanh %64 : vector<1x128xf32>
    %cst_27 = arith.constant 5.000000e-01 : f32
    %66 = vector.broadcast %cst_27 : f32 to vector<1x128xf32>
    %67 = arith.mulf %66, %65 : vector<1x128xf32>
    %cst_28 = arith.constant 5.000000e-01 : f32
    %68 = vector.broadcast %cst_28 : f32 to vector<1x128xf32>
    %69 = arith.addf %67, %68 : vector<1x128xf32>
    %70 = vector.shape_cast %27 : vector<1x128xf32> to vector<1x1x128xf32>
    %71 = vector.shape_cast %48 : vector<1x128xf32> to vector<1x1x128xf32>
    %72 = vector.shape_cast %69 : vector<1x128xf32> to vector<1x1x128xf32>
    %73 = tpu.concatenate %70, %71, %72 in 0 : vector<1x1x128xf32>, vector<1x1x128xf32>, vector<1x1x128xf32> -> vector<3x1x128xf32>
    %c0_29 = arith.constant 0 : index
    %c0_30 = arith.constant 0 : index
    %c0_31 = arith.constant 0 : index
    %74 = vector.load %arg4[%c0_29, %c0_30, %c0_31] : memref<3x1x128xf32, #tpu.memory_space<vmem>>, vector<3x1x128xf32>
    tpu.vector_store %arg4[%c0_29, %c0_30, %c0_31], %73 {strides = array<i32>} : memref<3x1x128xf32, #tpu.memory_space<vmem>>, vector<3x1x128xf32>,
    return
  }
  func.func @transform_0(%arg0: i32) -> (i32, i32) {
    %c0_i32 = arith.constant 0 : i32
    %c0_i32_0 = arith.constant 0 : i32
    %c0_i32_1 = arith.constant 0 : i32
    return %c0_i32, %c0_i32_0 : i32, i32
  }
  func.func @transform_1(%arg0: i32) -> i32 {
    %c0_i32 = arith.constant 0 : i32
    %c0_i32_0 = arith.constant 0 : i32
    return %c0_i32 : i32
  }
  func.func @transform_2(%arg0: i32) -> (i32, i32, i32) {
    %c0_i32 = arith.constant 0 : i32
    %c0_i32_0 = arith.constant 0 : i32
    %c0_i32_1 = arith.constant 0 : i32
    return %c0_i32, %arg0, %c0_i32_0 : i32, i32, i32
  }
  func.func @transform_3(%arg0: i32) -> (i32, i32, i32) {
    %c0_i32 = arith.constant 0 : i32
    %c0_i32_0 = arith.constant 0 : i32
    %c0_i32_1 = arith.constant 0 : i32
    return %c0_i32, %arg0, %c0_i32_0 : i32, i32, i32
  }
}

</mosaic_0001>

<llo_original>
// kernel: tpu_custom_call.1
$region0: #{tpu_custom_call.1}
  #allocation0 [shape = 'u32[]', space=smem, size = 0x4, offset = 0x4, fixed_abs, tag = 'smem constant byte address 0x4 - core index']
  #allocation1 [shape = 'u32[144,128]{1,0:T(1,128)}', space=vmem, size = 0x12000, scoped, tag = 'internal scratch']
  %s0 = inlined_call_operand.hbm [shape: f32[3,3], index: 0, kind: input, shape index: {}]
  %s1 = inlined_call_operand.vmem [shape: f32[3], index: 1, kind: input, shape index: {}]
  %s2 = inlined_call_operand.vmem [shape: f32[3,1,128], index: 2, kind: input, shape index: {}]
  %s3 = inlined_call_operand.hbm [shape: f32[3,1,128], index: 3, kind: output, shape index: {}]
  %s4 = sld [smem:[#allocation0]]
  $region30: #{tpu_custom_call.1} parent=0
    _
  %s6 = ssub.s32 1, %s4
  %s7 = scalar_select 0, %s6, %s4
  $region1: #{tpu_custom_call.1} parent=0
    #allocation2 [shape = 'u8[2048]{0}', space=smem, size = 0x800, scoped, tag = 'input window, operand 0, single buffered']
    #allocation3 [shape = 's32[1]{0}', space=sflag, size = 0x4, scoped, tag = 'scoped memory for tpu_custom_call.1']
    #allocation4 [shape = 's32[1]{0}', space=sflag, size = 0x4, scoped, tag = 'scoped memory for tpu_custom_call.1']
    #allocation5 [shape = 's32[1]{0}', space=sflag, size = 0x4, scoped, tag = 'scoped memory for tpu_custom_call.1']
    #allocation6 [shape = 'u8[512]{0}', space=smem, size = 0x200, scoped, tag = 'input window, operand 1, single buffered']
    #allocation7 [shape = 'u8[1536]{0}', space=vmem, size = 0x800, scoped, tag = 'output window, operand 0, single buffered']
    %8 = vsyncpa [#allocation4], 0
    %9 = vsyncpa [#allocation5], 0
    %10 = vsyncpa [#allocation3], 0
    // Predicated region
    $region2: #{tpu_custom_call.1} parent=1 // pred_check
      _
    $region3: #{tpu_custom_call.1} parent=1 // pred_check_branch
      %12 = sbr.rel (0) target = $region5
    $region4: #{tpu_custom_call.1} parent=1 // pred_region
      %s14 = ssub.s32 64, 64
      %15 = vsyncadd [#allocation4], %s14
      %18 = dma.hbm_to_smem %s0, 64, [#allocation2], [#allocation4]
    $region5: #{tpu_custom_call.1} parent=1 // pred_fallthru
      _
    // Predicated region
    $region6: #{tpu_custom_call.1} parent=1 // pred_check
      _
    $region7: #{tpu_custom_call.1} parent=1 // pred_check_branch
      %20 = sbr.rel (0) target = $region9
    $region8: #{tpu_custom_call.1} parent=1 // pred_region
      %s22 = ssub.s32 16, 16
      %23 = vsyncadd [#allocation5], %s22
      %s25 = sshll.u32 %s1, 4
      %s26 = int_to_ptr.vmem [resolvable:$true] %s25
      %28 = dma.vmem_to_smem %s26, 16, [#allocation6], [#allocation5]
    $region9: #{tpu_custom_call.1} parent=1 // pred_fallthru
      _
    // Predicated region
    $region10: #{tpu_custom_call.1} parent=1 // pred_check
      _
    $region11: #{tpu_custom_call.1} parent=1 // pred_check_branch
      %30 = sbr.rel (0) target = $region13
    $region12: #{tpu_custom_call.1} parent=1 // pred_region
      _
    $region13: #{tpu_custom_call.1} parent=1 // pred_fallthru
      _
    // Predicated region
    $region14: #{tpu_custom_call.1} parent=1 // pred_check
      _
    $region15: #{tpu_custom_call.1} parent=1 // pred_check_branch
      %32 = sbr.rel (0) target = $region17
    $region16: #{tpu_custom_call.1} parent=1 // pred_region
      %33 = dma.done [#allocation4], 64
    $region17: #{tpu_custom_call.1} parent=1 // pred_fallthru
      _
    // Predicated region
    $region18: #{tpu_custom_call.1} parent=1 // pred_check
      _
    $region19: #{tpu_custom_call.1} parent=1 // pred_check_branch
      %35 = sbr.rel (0) target = $region21
    $region20: #{tpu_custom_call.1} parent=1 // pred_region
      %36 = dma.done [#allocation5], 16
    $region21: #{tpu_custom_call.1} parent=1 // pred_fallthru
      _
    %37 = sfence
    %v38 = vld [vmem:[%s2] sm:$0x1]
    %v39 = vld [vmem:[%s2 + $0x1] sm:$0x1]
    %v40 = vld [vmem:[%s2 + $0x2] sm:$0x1]
    %s41 = sld [smem:[#allocation2]]
    %v42 = vstv %s41
    %v43 = vmul.f32 %v42, %v38
    %s44 = sld [smem:[#allocation2 + $0x1]]
    %v45 = vstv %s44
    %v46 = vmul.f32 %v45, %v39
    %v47 = vadd.f32 %v43, %v46
    %s48 = sld [smem:[#allocation2 + $0x2]]
    %v49 = vstv %s48
    %v50 = vmul.f32 %v49, %v40
    %v51 = vadd.f32 %v47, %v50
    %s52 = sld [smem:[#allocation6]]
    %v53 = vstv %s52
    %v54 = vadd.f32 %v51, %v53
    %v55 = vmul.f32 %v54, 0.5
    %v56 = vtanh.pop %v55
    %v57 = vmul.f32 %v56, 0.5
    %v58 = vadd.f32 %v57, 0.5
    %s59 = sld [smem:[#allocation2 + $0x80]]
    %v60 = vstv %s59
    %v61 = vmul.f32 %v60, %v38
    %s62 = sld [smem:[#allocation2 + $0x81]]
    %v63 = vstv %s62
    %v64 = vmul.f32 %v63, %v39
    %v65 = vadd.f32 %v61, %v64
    %s66 = sld [smem:[#allocation2 + $0x82]]
    %v67 = vstv %s66
    %v68 = vmul.f32 %v67, %v40
    %v69 = vadd.f32 %v65, %v68
    %s70 = sld [smem:[#allocation6 + $0x1]]
    %v71 = vstv %s70
    %v72 = vadd.f32 %v69, %v71
    %v73 = vmul.f32 %v72, 0.5
    %v74 = vtanh.pop %v73
    %v75 = vmul.f32 %v74, 0.5
    %v76 = vadd.f32 %v75, 0.5
    %s77 = sld [smem:[#allocation2 + $0x100]]
    %v78 = vstv %s77
    %v79 = vmul.f32 %v78, %v38
    %s80 = sld [smem:[#allocation2 + $0x101]]
    %v81 = vstv %s80
    %v82 = vmul.f32 %v81, %v39
    %v83 = vadd.f32 %v79, %v82
    %s84 = sld [smem:[#allocation2 + $0x102]]
    %v85 = vstv %s84
    %v86 = vmul.f32 %v85, %v40
    %v87 = vadd.f32 %v83, %v86
    %s88 = sld [smem:[#allocation6 + $0x2]]
    %v89 = vstv %s88
    %v90 = vadd.f32 %v87, %v89
    %v91 = vmul.f32 %v90, 0.5
    %v92 = vtanh.pop %v91
    %v93 = vmul.f32 %v92, 0.5
    %v94 = vadd.f32 %v93, 0.5
    %95 = vst [vmem:[#allocation7] sm:$0x1] %v58
    %96 = vst [vmem:[#allocation7 + $0x1] sm:$0x1] %v76
    %97 = vst [vmem:[#allocation7 + $0x2] sm:$0x1] %v94
    // Predicated region
    $region22: #{tpu_custom_call.1} parent=1 // pred_check
      _
    $region23: #{tpu_custom_call.1} parent=1 // pred_check_branch
      %99 = sbr.rel (0) target = $region25
    $region24: #{tpu_custom_call.1} parent=1 // pred_region
      %s101 = ssub.s32 48, 48
      %102 = vsyncadd [#allocation3], %s101
      %s103 = sshll.u32 [#allocation7], 4
      %s104 = int_to_ptr.vmem [resolvable:$true] %s103
      %109 = dma.vmem_to_hbm [thread:$0]  %s104, 48, %s3, [#allocation3], 16, 16, 1
    $region25: #{tpu_custom_call.1} parent=1 // pred_fallthru
      _
    // Predicated region
    $region26: #{tpu_custom_call.1} parent=1 // pred_check
      _
    $region27: #{tpu_custom_call.1} parent=1 // pred_check_branch
      %111 = sbr.rel (0) target = $region29
    $region28: #{tpu_custom_call.1} parent=1 // pred_region
      %112 = dma.done [#allocation3], 48
    $region29: #{tpu_custom_call.1} parent=1 // pred_fallthru
      _
    %113 = vsyncpa [#allocation3], 1
    %114 = vsyncpa [#allocation4], 1
    %115 = vsyncpa [#allocation5], 1

</llo_original>
